<compile_context>
chip_gen: v6e
topology: v6e:2x2x1
jax: 0.10.0
libtpu: 0.0.40
codegen_flags: <defaults>
</compile_context>

<pallas_src>
from functools import partial

import jax
import jax.numpy as jnp
from jax import lax
from jax.experimental import pallas as pl
from jax.experimental.pallas import tpu as pltpu


# ---------------------------------------------------------------------------
# Kernels
# ---------------------------------------------------------------------------

def _fused_kernel(len_ref, w1_ref, w2_ref, x_ref, o_ref):
    """One batch row per grid step: masked mean -> MLP -> rescale, x read exactly once."""
    b = pl.program_id(0)
    c, t = x_ref.shape[1], x_ref.shape[2]
    length = len_ref[b]

    tidx = lax.broadcasted_iota(jnp.int32, (c, t), 1)                  # lane axis = time
    xm = jnp.where(tidx < length, x_ref[0], 0.0).astype(jnp.float32)   # (C, T)
    denom = jnp.maximum(length, 1).astype(jnp.float32)                 # guard length == 0
    pooled = jnp.sum(xm, axis=1, keepdims=True) / denom                # (C, 1) f32

    hidden = jnp.maximum(
        jnp.dot(w1_ref[...], pooled, preferred_element_type=jnp.float32), 0.0)   # (H, 1)
    scale = jax.nn.sigmoid(
        jnp.dot(w2_ref[...], hidden, preferred_element_type=jnp.float32))        # (C, 1)

    o_ref[0] = (x_ref[0].astype(jnp.float32) * scale).astype(o_ref.dtype)


def _pool_mlp_kernel(len_ref, w1_ref, w2_ref, x_ref, s_ref):
    """Pass 1 (fallback): masked sum over time tiles; on the last tile finish the mean and
    run the excitation MLP so the streaming rescale pass is a pure broadcast-multiply."""
    b = pl.program_id(0)
    ti = pl.program_id(1)
    nt = pl.num_programs(1)
    c, tt = x_ref.shape[1], x_ref.shape[2]
    length = len_ref[b]

    @pl.when(ti == 0)
    def _init():
        s_ref[...] = jnp.zeros_like(s_ref)

    in_range = ti * tt < length              # tile holds at least one valid step
    fully_valid = (ti + 1) * tt <= length    # no masking needed for interior tiles

    @pl.when(jnp.logical_and(in_range, fully_valid))
    def _interior():
        s_ref[0] += jnp.sum(x_ref[0].astype(jnp.float32), axis=1, keepdims=True)

    @pl.when(jnp.logical_and(in_range, jnp.logical_not(fully_valid)))
    def _boundary():
        tidx = ti * tt + lax.broadcasted_iota(jnp.int32, (c, tt), 1)
        xm = jnp.where(tidx < length, x_ref[0], 0.0).astype(jnp.float32)
        s_ref[0] += jnp.sum(xm, axis=1, keepdims=True)

    @pl.when(ti == nt - 1)
    def _finalize():
        denom = jnp.maximum(length, 1).astype(jnp.float32)
        pooled = s_ref[0] / denom                                                 # (C, 1)
        hidden = jnp.maximum(
            jnp.dot(w1_ref[...], pooled, preferred_element_type=jnp.float32), 0.0)
        s_ref[0] = jax.nn.sigmoid(
            jnp.dot(w2_ref[...], hidden, preferred_element_type=jnp.float32))     # (C, 1)


def _rescale_kernel(s_ref, x_ref, o_ref):
    """Pass 2 (fallback): channel-wise rescale of one (1, C, TT) tile. No MXU, no weights."""
    o_ref[0] = (x_ref[0].astype(jnp.float32) * s_ref[0]).astype(o_ref.dtype)


# ---------------------------------------------------------------------------
# Wrapper / dispatch
# ---------------------------------------------------------------------------

def _round_up(v, m):
    return ((v + m - 1) // m) * m


def _vmem_budget_bytes():
    """Generation-aware VMEM budget (64 MiB physical on v7x, 128 MiB on v5e/v6e)."""
    cap = 64 * 1024 * 1024  # conservative default = v7x physical VMEM
    try:
        info = pltpu.get_tpu_info()
        cap = int(getattr(info, "vmem_capacity_bytes", cap)) or cap
    except Exception:
        pass
    # ~30% headroom for compiler scratch, semaphores and pipeline slack.
    return max(min(int(cap * 0.7), 112 * 1024 * 1024), 16 * 1024 * 1024)


def _fused_fits(c, t, itemsize, budget):
    # x in + out double-buffered (2 * 2) plus ~2 f32-sized temporaries inside the kernel.
    need = c * t * (4 * itemsize + 2 * 4)
    return need <= budget


def _pick_time_tile(c, t, itemsize, budget, max_time_tile):
    if max_time_tile is not None:
        return int(max_time_tile)
    # Per-step VMEM ≈ double-buffered x in + out (2*2) plus ~2 f32 temporaries per column.
    per_col = c * (4 * itemsize + 2 * 4)
    tt = (budget // max(per_col, 1)) // 128 * 128
    tt = max(tt, 128)
    tt = min(tt, 2048)                 # diminishing returns past ~2k lanes per step
    tt = min(tt, _round_up(t, 128))    # never allocate a bigger block than the array needs
    return int(tt)


@partial(jax.jit, static_argnames=("force_two_pass", "max_time_tile"))
def se_block(x, length, w1, w2, *, force_two_pass=False, max_time_tile=None):
    b, c, t = x.shape
    h = w1.shape[0]
    itemsize = jnp.dtype(x.dtype).itemsize
    budget = _vmem_budget_bytes()

    # ---------------- Fused single-pass path (1 read + 1 write of x) ----------------
    if not force_two_pass and _fused_fits(c, t, itemsize, budget):
        return pl.pallas_call(
            _fused_kernel,
            out_shape=jax.ShapeDtypeStruct((b, c, t), x.dtype),
            grid_spec=pltpu.PrefetchScalarGridSpec(
                num_scalar_prefetch=1,
                grid=(b,),
                in_specs=[
                    pl.BlockSpec((h, c), lambda bi, _len: (0, 0)),       # w1 resident
                    pl.BlockSpec((c, h), lambda bi, _len: (0, 0)),       # w2 resident
                    pl.BlockSpec((1, c, t), lambda bi, _len: (bi, 0, 0)),
                ],
                out_specs=pl.BlockSpec((1, c, t), lambda bi, _len: (bi, 0, 0)),
            ),
            compiler_params=pltpu.CompilerParams(
                dimension_semantics=("parallel",),
                vmem_limit_bytes=budget,
            ),
        )(length, w1, w2, x)

    # ---------------- Two-pass streaming fallback ----------------
    tt = _pick_time_tile(c, t, itemsize, budget, max_time_tile)
    nt = pl.cdiv(t, tt)

    def _x_pool_map(bi, ti, len_ref):
        # Clamp fully-padded tiles onto the last tile that holds valid data so Pallas
        # re-uses the resident block instead of streaming padding from HBM.
        last = (jnp.maximum(len_ref[bi], 1) + (tt - 1)) // tt - 1
        return (bi, 0, jnp.minimum(ti, last))

    # Pass 1: masked mean + excitation MLP -> per-batch scale s (B, C, 1) f32.
    scale = pl.pallas_call(
        _pool_mlp_kernel,
        out_shape=jax.ShapeDtypeStruct((b, c, 1), jnp.float32),
        grid_spec=pltpu.PrefetchScalarGridSpec(
            num_scalar_prefetch=1,
            grid=(b, nt),
            in_specs=[
                pl.BlockSpec((h, c), lambda bi, ti, _len: (0, 0)),       # w1 resident
                pl.BlockSpec((c, h), lambda bi, ti, _len: (0, 0)),       # w2 resident
                pl.BlockSpec((1, c, tt), _x_pool_map),                   # x tile
            ],
            out_specs=pl.BlockSpec((1, c, 1), lambda bi, ti, _len: (bi, 0, 0)),
        ),
        compiler_params=pltpu.CompilerParams(
            dimension_semantics=("parallel", "arbitrary"),
            vmem_limit_bytes=budget,
        ),
    )(length, w1, w2, x)

    # Pass 2: pure broadcast-multiply rescale, streaming over (batch, time) tiles.
    out = pl.pallas_call(
        _rescale_kernel,
        out_shape=jax.ShapeDtypeStruct((b, c, t), x.dtype),
        grid_spec=pltpu.PrefetchScalarGridSpec(
            num_scalar_prefetch=0,
            grid=(b, nt),
            in_specs=[
                pl.BlockSpec((1, c, 1), lambda bi, ti: (bi, 0, 0)),      # per-batch scale
                pl.BlockSpec((1, c, tt), lambda bi, ti: (bi, 0, ti)),    # x tile
            ],
            out_specs=pl.BlockSpec((1, c, tt), lambda bi, ti: (bi, 0, ti)),
        ),
        compiler_params=pltpu.CompilerParams(
            dimension_semantics=("parallel", "parallel"),
            vmem_limit_bytes=budget,
        ),
    )(scale, x)
    return out


# ---------------------------------------------------------------------------
# Pure-JAX reference matching the PyTorch forward
# ---------------------------------------------------------------------------

def se_block_reference(x, length, w1, w2):
    t = x.shape[-1]
    tidx = jnp.arange(t)[None, None, :]                              # (1, 1, T)
    mask = (tidx < length[:, None, None]).astype(x.dtype)            # (B, 1, T)
    denom = jnp.maximum(length, 1)[:, None].astype(x.dtype)          # (B, 1)
    pooled = (x * mask).sum(-1) / denom                              # (B, C)
    hid = jnp.maximum(pooled @ w1.T, 0.0)                            # (B, H)
    s = jax.nn.sigmoid(hid @ w2.T)                                   # (B, C)
    return x * s[:, :, None]


if __name__ == "__main__":
    # Small shapes consistent with the module: channel must be >= r (=16).
    B, C, T, R = 2, 64, 320, 16       # T not a multiple of 128 -> exercises cdiv edge tiles
    H = C // R                        # hidden = 4

    key = jax.random.PRNGKey(0)
    kx, k1, k2 = jax.random.split(key, 3)

    x = jax.random.normal(kx, (B, C, T), dtype=jnp.float32)
    length = jnp.array([T, 173], dtype=jnp.int32)   # variable valid lengths per batch element

    # PyTorch nn.Linear default init: U(-1/sqrt(fan_in), 1/sqrt(fan_in)), bias-free.
    w1 = jax.random.uniform(k1, (H, C), jnp.float32, -(C ** -0.5), C ** -0.5)
    w2 = jax.random.uniform(k2, (C, H), jnp.float32, -(H ** -0.5), H ** -0.5)

    ref = se_block_reference(x, length, w1, w2)

    # Default dispatch (fused single-pass for these shapes).
    out_fused = jax.block_until_ready(se_block(x, length, w1, w2))
    assert out_fused.shape == (B, C, T)
    assert jnp.allclose(out_fused, ref, atol=1e-5, rtol=1e-5), "fused kernel mismatch"

    # Force the two-pass streaming path with small tiles to exercise edge/padding handling.
    out_stream = jax.block_until_ready(
        se_block(x, length, w1, w2, force_two_pass=True, max_time_tile=128))
    assert jnp.allclose(out_stream, ref, atol=1e-5, rtol=1e-5), "two-pass kernel mismatch"

    print("KERNEL_OK")
</pallas_src>

<mosaic_0001>
module attributes {stable_mosaic.version = 11 : i64} {
  func.func @_fused_kernel(%arg0: i32, %arg1: memref<2xi32, #tpu.memory_space<smem>>, %arg2: memref<4x64xf32, #tpu.memory_space<vmem>>, %arg3: memref<64x4xf32, #tpu.memory_space<vmem>>, %arg4: memref<1x64x320xf32, #tpu.memory_space<vmem>>, %arg5: memref<1x64x320xf32, #tpu.memory_space<vmem>>) attributes {dimension_semantics = [#tpu.dimension_semantics<parallel>], iteration_bounds = array<i64: 2>, scalar_prefetch = 1 : i64, scratch_operands = 0 : i64, tpu.core_type = #tpu.core_type<tc>, window_params = [{pipeline_mode = #tpu.pipeline_mode<synchronous>, transform_indices = @transform_0, window_bounds = array<i64: 4, 64>}, {pipeline_mode = #tpu.pipeline_mode<synchronous>, transform_indices = @transform_1, window_bounds = array<i64: 64, 4>}, {transform_indices = @transform_2, window_bounds = array<i64: 1, 64, 320>}, {transform_indices = @transform_3, window_bounds = array<i64: 1, 64, 320>}]} {
    %0 = arith.index_cast %arg0 : i32 to index
    %1 = memref.load %arg1[%0] : memref<2xi32, #tpu.memory_space<smem>>
    %2 = tpu.iota {dimensions = array<i32: 1>} : vector<64x320xi32>
    %3 = vector.broadcast %1 : i32 to vector<64x320xi32>
    %4 = arith.cmpi slt, %2, %3 : vector<64x320xi32>
    %c0 = arith.constant 0 : index
    %c0_0 = arith.constant 0 : index
    %c0_1 = arith.constant 0 : index
    %5 = vector.load %arg4[%c0, %c0_0, %c0_1] : memref<1x64x320xf32, #tpu.memory_space<vmem>>, vector<1x64x320xf32>
    %6 = vector.shape_cast %5 : vector<1x64x320xf32> to vector<64x320xf32>
    %cst = arith.constant 0.000000e+00 : f32
    %7 = vector.broadcast %cst : f32 to vector<64x320xf32>
    %8 = arith.select %4, %6, %7 : vector<64x320xi1>, vector<64x320xf32>
    %c1_i32 = arith.constant 1 : i32
    %9 = arith.maxsi %1, %c1_i32 : i32
    %10 = arith.sitofp %9 : i32 to f32
    %cst_2 = arith.constant dense<0.000000e+00> : vector<64xf32>
    %11 = vector.multi_reduction <add>, %8, %cst_2 [1] : vector<64x320xf32> to vector<64xf32>
    %12 = vector.shape_cast %11 : vector<64xf32> to vector<64x1xf32>
    %13 = vector.broadcast %10 : f32 to vector<64x1xf32>
    %14 = arith.divf %12, %13 : vector<64x1xf32>
    %c0_3 = arith.constant 0 : index
    %c0_4 = arith.constant 0 : index
    %15 = vector.load %arg2[%c0_3, %c0_4] : memref<4x64xf32, #tpu.memory_space<vmem>>, vector<4x64xf32>
    %cst_5 = arith.constant dense<0.000000e+00> : vector<4x1xf32>
    %16 = tpu.matmul %15, %14, %cst_5 {dimension_numbers = #tpu.dot_dimension_numbers<[1], [0], [0], [1], [0, 0, 1, 1], [], []>} : vector<4x64xf32>, vector<64x1xf32>, vector<4x1xf32> -> vector<4x1xf32>
    %cst_6 = arith.constant 0.000000e+00 : f32
    %17 = vector.broadcast %cst_6 : f32 to vector<4x1xf32>
    %18 = arith.maximumf %16, %17 : vector<4x1xf32>
    %c0_7 = arith.constant 0 : index
    %c0_8 = arith.constant 0 : index
    %19 = vector.load %arg3[%c0_7, %c0_8] : memref<64x4xf32, #tpu.memory_space<vmem>>, vector<64x4xf32>
    %cst_9 = arith.constant dense<0.000000e+00> : vector<64x1xf32>
    %20 = tpu.matmul %19, %18, %cst_9 {dimension_numbers = #tpu.dot_dimension_numbers<[1], [0], [0], [1], [0, 0, 1, 1], [], []>} : vector<64x4xf32>, vector<4x1xf32>, vector<64x1xf32> -> vector<64x1xf32>
    %21 = arith.negf %20 : vector<64x1xf32>
    %22 = math.exp %21 : vector<64x1xf32>
    %cst_10 = arith.constant 1.000000e+00 : f32
    %23 = vector.broadcast %cst_10 : f32 to vector<64x1xf32>
    %24 = arith.addf %23, %22 : vector<64x1xf32>
    %25 = arith.divf %23, %24 : vector<64x1xf32>
    %c0_11 = arith.constant 0 : index
    %c0_12 = arith.constant 0 : index
    %c0_13 = arith.constant 0 : index
    %26 = vector.load %arg4[%c0_11, %c0_12, %c0_13] : memref<1x64x320xf32, #tpu.memory_space<vmem>>, vector<1x64x320xf32>
    %27 = vector.shape_cast %26 : vector<1x64x320xf32> to vector<64x320xf32>
    %28 = vector.broadcast %25 : vector<64x1xf32> to vector<64x320xf32>
    %29 = arith.mulf %27, %28 : vector<64x320xf32>
    %c0_14 = arith.constant 0 : index
    %c0_15 = arith.constant 0 : index
    %c0_16 = arith.constant 0 : index
    %30 = vector.load %arg5[%c0_14, %c0_15, %c0_16] : memref<1x64x320xf32, #tpu.memory_space<vmem>>, vector<1x64x320xf32>
    %31 = vector.shape_cast %30 : vector<1x64x320xf32> to vector<64x320xf32>
    %32 = vector.shape_cast %29 : vector<64x320xf32> to vector<1x64x320xf32>
    tpu.vector_store %arg5[%c0_14, %c0_15, %c0_16], %32 {strides = array<i32>} : memref<1x64x320xf32, #tpu.memory_space<vmem>>, vector<1x64x320xf32>,
    return
  }
  func.func @transform_0(%arg0: i32, %arg1: memref<2xi32, #tpu.memory_space<smem>>) -> (i32, i32) {
    %c0_i32 = arith.constant 0 : i32
    %c0_i32_0 = arith.constant 0 : i32
    %c0_i32_1 = arith.constant 0 : i32
    return %c0_i32, %c0_i32_0 : i32, i32
  }
  func.func @transform_1(%arg0: i32, %arg1: memref<2xi32, #tpu.memory_space<smem>>) -> (i32, i32) {
    %c0_i32 = arith.constant 0 : i32
    %c0_i32_0 = arith.constant 0 : i32
    %c0_i32_1 = arith.constant 0 : i32
    return %c0_i32, %c0_i32_0 : i32, i32
  }
  func.func @transform_2(%arg0: i32, %arg1: memref<2xi32, #tpu.memory_space<smem>>) -> (i32, i32, i32) {
    %c0_i32 = arith.constant 0 : i32
    %c0_i32_0 = arith.constant 0 : i32
    %c0_i32_1 = arith.constant 0 : i32
    return %arg0, %c0_i32, %c0_i32_0 : i32, i32, i32
  }
  func.func @transform_3(%arg0: i32, %arg1: memref<2xi32, #tpu.memory_space<smem>>) -> (i32, i32, i32) {
    %c0_i32 = arith.constant 0 : i32
    %c0_i32_0 = arith.constant 0 : i32
    %c0_i32_1 = arith.constant 0 : i32
    return %arg0, %c0_i32, %c0_i32_0 : i32, i32, i32
  }
}

</mosaic_0001>

<llo_original>
// kernel: se_block.1
$region0: #{se_block.1}
  #allocation0 [shape = 'u32[]', space=smem, size = 0x4, offset = 0x4, fixed_abs, tag = 'smem constant byte address 0x4 - core index']
  #allocation1 [shape = 'u32[144,128]{1,0:T(1,128)}', space=vmem, size = 0x12000, scoped, tag = 'internal scratch']
  #allocation2 [shape = 's32[1]{0}', space=sflag, size = 0x4, scoped, tag = 'scoped memory for se_block.1']
  #allocation3 [shape = 'u8[512]{0}', space=smem, size = 0x200, scoped, tag = 'prefetched SMEM operand 0']
  %s0 = inlined_call_operand.vmem [shape: s32[2], index: 0, kind: input, shape index: {}]
  %s1 = inlined_call_operand.vmem [shape: f32[4,64], index: 1, kind: input, shape index: {}]
  %s2 = inlined_call_operand.vmem [shape: f32[64,4], index: 2, kind: input, shape index: {}]
  %s3 = inlined_call_operand.hbm [shape: f32[2,64,320], index: 3, kind: input, shape index: {}]
  %s4 = inlined_call_operand.hbm [shape: f32[2,64,320], index: 4, kind: output, shape index: {}]
  %s5 = sld [smem:[#allocation0]]
  $region49: #{se_block.1} parent=0
    _
  %s7 = ssub.s32 1, %s5
  %s8 = scalar_select 0, %s7, %s5
  %s9 = sshll.u32 %s0, 4
  %s10 = int_to_ptr.vmem [resolvable:$true] %s9
  %12 = dma.vmem_to_smem %s10, 16, [#allocation3], [#allocation2]
  %13 = dma.done [#allocation2], 16
  %14 = sfence
  $region1: #{se_block.1} parent=0
    #allocation4 [shape = 'u8[196608]{0}', space=vmem, size = 0x30000, scoped, tag = 'input window, operand 3']
    #allocation5 [shape = 's32[2]{0}', space=sflag, size = 0x8, scoped, tag = 'scoped memory for se_block.1']
    #allocation6 [shape = 's32[2]{0}', space=sflag, size = 0x8, scoped, tag = 'scoped memory for se_block.1']
    #allocation7 [shape = 'u8[196608]{0}', space=vmem, size = 0x30000, scoped, tag = 'output window, operand 0']
    %15 = vsyncpa [#allocation5], 0
    %s16 = scalar_lea.sflag [#allocation5], 1
    %17 = vsyncpa %s16, 0
    %18 = vsyncpa [#allocation6], 0
    %s19 = scalar_lea.sflag [#allocation6], 1
    %20 = vsyncpa %s19, 0
    loop: start=0, step=1, limit=4
    $region2: #{se_block.1} parent=1 // loop_pre_header
      _
    $region3: #{se_block.1} parent=1 // loop_header
      %s22 = sphi 0, %s26
      %p23 = scmp.ge.s32.totalorder %s22, 4
      %s30 = sphi 0, %s30
      %s32 = sphi 0, %s30
      %s33 = sphi 0, %s32
      %s47 = sphi 0, %s33
      %s51 = sphi 0, %s51
      %s53 = sphi 0, %s51
      %s54 = sphi 0, %s53
      %s68 = sphi 0, %s54
      %s74 = sphi 0, %s76
      %s77 = sphi 0, %s74
      %s78 = sphi 0, %s77
      %s94 = sphi 0, %s78
      %s100 = sphi 0, %s102
      %s103 = sphi 0, %s100
      %s104 = sphi 0, %s103
      %s120 = sphi 0, %s104
    $region4: #{se_block.1} parent=1 // loop_header_branch
      %25 = sbr.rel (%p23) target = $region8
    $region5: #{se_block.1} parent=1 // loop_body
      %s27 = ssub.s32 %s22, 1
      %s28 = ssub.s32 %s22, 2
      %s29 = sadd.s32 %s22, 1
      %s31 = sadd.s32 %s30, 1
      %p34 = scmp.eq.s32.totalorder %s22, 1
      %p35 = scmp.ne.s32.totalorder %s30, %s32
      %p36 = scmp.eq.s32.totalorder %s22, 0
      %p37 = por %p35, %p36
      %p38 = scmp.ne.s32.totalorder %s30, %s32
      %p39 = scmp.eq.s32.totalorder %s27, 1
      %p40 = por %p38, %p39
      %p41 = scmp.ne.s32.totalorder %s32, %s33
      %p42 = scmp.eq.s32.totalorder %s27, 0
      %p43 = por %p41, %p42
      %p44 = scmp.ne.s32.totalorder %s32, %s33
      %p45 = scmp.eq.s32.totalorder %s28, 1
      %p46 = por %p44, %p45
      %p48 = scmp.ne.s32.totalorder %s33, %s47
      %p49 = scmp.eq.s32.totalorder %s28, 0
      %p50 = por %p48, %p49
      %s52 = sadd.s32 %s51, 1
      %p55 = scmp.eq.s32.totalorder %s22, 1
      %p56 = scmp.ne.s32.totalorder %s51, %s53
      %p57 = scmp.eq.s32.totalorder %s22, 0
      %p58 = por %p56, %p57
      %p59 = scmp.ne.s32.totalorder %s51, %s53
      %p60 = scmp.eq.s32.totalorder %s27, 1
      %p61 = por %p59, %p60
      %p62 = scmp.ne.s32.totalorder %s53, %s54
      %p63 = scmp.eq.s32.totalorder %s27, 0
      %p64 = por %p62, %p63
      %p65 = scmp.ne.s32.totalorder %s53, %s54
      %p66 = scmp.eq.s32.totalorder %s28, 1
      %p67 = por %p65, %p66
      %p69 = scmp.ne.s32.totalorder %s54, %s68
      %p70 = scmp.eq.s32.totalorder %s28, 0
      %p71 = por %p69, %p70
      %s72 = ssub.s32 %s22, %s29
      %p73 = scmp.eq.s32.totalorder %s72, 0
      %s75 = sadd.s32 %s74, 1
      %s76 = scalar_select %p73, %s74, %s75
      %p79 = pneg %p73
      %p80 = scmp.eq.s32.totalorder %s22, 1
      %p81 = por %p79, %p80
      %p82 = scmp.ne.s32.totalorder %s74, %s77
      %p83 = scmp.eq.s32.totalorder %s22, 0
      %p84 = por %p82, %p83
      %p85 = scmp.ne.s32.totalorder %s74, %s77
      %p86 = scmp.eq.s32.totalorder %s27, 1
      %p87 = por %p85, %p86
      %p88 = scmp.ne.s32.totalorder %s77, %s78
      %p89 = scmp.eq.s32.totalorder %s27, 0
      %p90 = por %p88, %p89
      %p91 = scmp.ne.s32.totalorder %s77, %s78
      %p92 = scmp.eq.s32.totalorder %s28, 1
      %p93 = por %p91, %p92
      %p95 = scmp.ne.s32.totalorder %s78, %s94
      %p96 = scmp.eq.s32.totalorder %s28, 0
      %p97 = por %p95, %p96
      %s98 = ssub.s32 %s22, %s29
      %p99 = scmp.eq.s32.totalorder %s98, 0
      %s101 = sadd.s32 %s100, 1
      %s102 = scalar_select %p99, %s100, %s101
      %p105 = pneg %p99
      %p106 = scmp.eq.s32.totalorder %s22, 1
      %p107 = por %p105, %p106
      %p108 = scmp.ne.s32.totalorder %s100, %s103
      %p109 = scmp.eq.s32.totalorder %s22, 0
      %p110 = por %p108, %p109
      %p111 = scmp.ne.s32.totalorder %s100, %s103
      %p112 = scmp.eq.s32.totalorder %s27, 1
      %p113 = por %p111, %p112
      %p114 = scmp.ne.s32.totalorder %s103, %s104
      %p115 = scmp.eq.s32.totalorder %s27, 0
      %p116 = por %p114, %p115
      %p117 = scmp.ne.s32.totalorder %s103, %s104
      %p118 = scmp.eq.s32.totalorder %s28, 1
      %p119 = por %p117, %p118
      %p121 = scmp.ne.s32.totalorder %s104, %s120
      %p122 = scmp.eq.s32.totalorder %s28, 0
      %p123 = por %p121, %p122
      %p124 = scmp.le.s32.totalorder 1, %s22
      %p125 = scmp.lt.s32.totalorder %s22, 3
      %p126 = pnand %p124, %p125
      %p127 = pneg %p126
      // Predicated region
      $region9: #{se_block.1} parent=5 // pred_check
        _
      $region10: #{se_block.1} parent=5 // pred_check_branch
        %129 = sbr.rel (%p126) target = $region12
      $region11: #{se_block.1} parent=5 // pred_region
        %s130 = ssub.s32 %s22, 1
        // Predicated region
        $region13: #{se_block.1} parent=11 // pred_check
          %p131 = pneg %p43
        $region14: #{se_block.1} parent=11 // pred_check_branch
          %133 = sbr.rel (%p131) target = $region16
        $region15: #{se_block.1} parent=11 // pred_region
          _
        $region16: #{se_block.1} parent=11 // pred_fallthru
          _
        // Predicated region
        $region17: #{se_block.1} parent=11 // pred_check
          %p134 = pneg %p64
        $region18: #{se_block.1} parent=11 // pred_check_branch
          %136 = sbr.rel (%p134) target = $region20
        $region19: #{se_block.1} parent=11 // pred_region
          _
        $region20: #{se_block.1} parent=11 // pred_fallthru
          _
      $region12: #{se_block.1} parent=5 // pred_fallthru
        _
      %p137 = scmp.lt.s32.totalorder %s22, 2
      // Predicated region
      $region21: #{se_block.1} parent=5 // pred_check
        %p138 = pneg %p137
      $region22: #{se_block.1} parent=5 // pred_check_branch
        %140 = sbr.rel (%p138) target = $region24
      $region23: #{se_block.1} parent=5 // pred_region
        // Predicated region
        $region25: #{se_block.1} parent=23 // pred_check
          %p141 = pneg %p84
        $region26: #{se_block.1} parent=23 // pred_check_branch
          %143 = sbr.rel (%p141) target = $region28
        $region27: #{se_block.1} parent=23 // pred_region
          %s144 = sand.u32 %s74, 1
          %s145 = scalar_lea.sflag [#allocation5], %s144
          %s146 = sand.u32 %s74, 1
          %s147 = smul.addr %s146, 192
          %s148 = scalar_lea.vmem [#allocation4], %s147
          %s150 = ssub.s32 3072, 3072
          %151 = vsyncadd %s145, %s150
          %s152 = smul.addr %s22, 24
          %s153 = smul.addr %s152, 128
          %s154 = scalar_lea.hbm %s3, %s153
          %s155 = sshll.u32 %s148, 4
          %s156 = int_to_ptr.vmem [resolvable:$true] %s155
          %161 = dma.hbm_to_vmem [thread:$0]  %s154, 3072, %s156, %s145, 384, 384, 24
        $region28: #{se_block.1} parent=23 // pred_fallthru
          _
      $region24: #{se_block.1} parent=5 // pred_fallthru
        _
      %p162 = scmp.le.s32.totalorder 1, %s22
      %p163 = scmp.lt.s32.totalorder %s22, 3
      %p164 = pnand %p162, %p163
      %p165 = pneg %p164
      // Predicated region
      $region29: #{se_block.1} parent=5 // pred_check
        _
      $region30: #{se_block.1} parent=5 // pred_check_branch
        %167 = sbr.rel (%p164) target = $region32
      $region31: #{se_block.1} parent=5 // pred_region
        %s168 = ssub.s32 %s22, 1
        %s169 = sand.u32 %s77, 1
        %s170 = scalar_lea.sflag [#allocation5], %s169
        %s171 = sand.u32 %s77, 1
        %s172 = smul.addr %s171, 192
        %s173 = scalar_lea.vmem [#allocation4], %s172
        // Predicated region
        $region33: #{se_block.1} parent=31 // pred_check
          %p174 = pneg %p90
        $region34: #{se_block.1} parent=31 // pred_check_branch
          %176 = sbr.rel (%p174) target = $region36
        $region35: #{se_block.1} parent=31 // pred_region
          %177 = dma.done %s170, 3072
        $region36: #{se_block.1} parent=31 // pred_fallthru
          _
        %p178 = pneg %p43
        %p179 = pneg %p40
        %p180 = pneg %p64
        %p181 = pneg %p61
        %s182 = sand.u32 %s77, 1
        %s183 = scalar_lea.sflag [#allocation5], %s182
        %s184 = sand.u32 %s77, 1
        %s185 = smul.addr %s184, 192
        %s186 = scalar_lea.vmem [#allocation4], %s185
        %p187 = pneg %p90
        %p188 = pneg %p87
        %p189 = pneg %p116
        %p190 = pneg %p113
        %s191 = sand.u32 %s103, 1
        %s192 = scalar_lea.sflag [#allocation6], %s191
        %s193 = sand.u32 %s103, 1
        %s194 = smul.addr %s193, 192
        %s195 = scalar_lea.vmem [#allocation7], %s194
        %s196 = sld [smem:[#allocation3 + %s27]]
        %v197 = vlaneseq
        %v198 = vand.u32 %v197, 127
        %v199 = vadd.s32 %v198, 128
        %v200 = vadd.s32 %v198, 256
        %v201 = vstv %s196
        %vm202 = vcmp.lt.s32.totalorder %v198, %v201
        %vm203 = vcmp.lt.s32.totalorder %v199, %v201
        %vm204 = vcmp.lt.s32.totalorder %v200, %v201
        %v205 = vld [vmem:[%s173] sm:$0xff]
        %v206 = vld [vmem:[%s173 + $0x8] sm:$0xff]
        %v207 = vld [vmem:[%s173 + $0x10] sm:$0xff]
        %v208 = vld [vmem:[%s173 + $0x18] sm:$0xff]
        %v209 = vld [vmem:[%s173 + $0x20] sm:$0xff]
        %v210 = vld [vmem:[%s173 + $0x28] sm:$0xff]
        %v211 = vld [vmem:[%s173 + $0x30] sm:$0xff]
        %v212 = vld [vmem:[%s173 + $0x38] sm:$0xff]
        %v213 = vld [vmem:[%s173 + $0x40] sm:$0xff]
        %v214 = vld [vmem:[%s173 + $0x48] sm:$0xff]
        %v215 = vld [vmem:[%s173 + $0x50] sm:$0xff]
        %v216 = vld [vmem:[%s173 + $0x58] sm:$0xff]
        %v217 = vld [vmem:[%s173 + $0x60] sm:$0xff]
        %v218 = vld [vmem:[%s173 + $0x68] sm:$0xff]
        %v219 = vld [vmem:[%s173 + $0x70] sm:$0xff]
        %v220 = vld [vmem:[%s173 + $0x78] sm:$0xff]
        %v221 = vld [vmem:[%s173 + $0x80] sm:$0xff]
        %v222 = vld [vmem:[%s173 + $0x88] sm:$0xff]
        %v223 = vld [vmem:[%s173 + $0x90] sm:$0xff]
        %v224 = vld [vmem:[%s173 + $0x98] sm:$0xff]
        %v225 = vld [vmem:[%s173 + $0xa0] sm:$0xff]
        %v226 = vld [vmem:[%s173 + $0xa8] sm:$0xff]
        %v227 = vld [vmem:[%s173 + $0xb0] sm:$0xff]
        %v228 = vld [vmem:[%s173 + $0xb8] sm:$0xff]
        %v229 = vsel %vm202, %v205, 0.0
        %v230 = vsel %vm203, %v206, 0.0
        %v231 = vsel %vm204, %v207, 0.0
        %v232 = vsel %vm202, %v208, 0.0
        %v233 = vsel %vm203, %v209, 0.0
        %v234 = vsel %vm204, %v210, 0.0
        %v235 = vsel %vm202, %v211, 0.0
        %v236 = vsel %vm203, %v212, 0.0
        %v237 = vsel %vm204, %v213, 0.0
        %v238 = vsel %vm202, %v214, 0.0
        %v239 = vsel %vm203, %v215, 0.0
        %v240 = vsel %vm204, %v216, 0.0
        %v241 = vsel %vm202, %v217, 0.0
        %v242 = vsel %vm203, %v218, 0.0
        %v243 = vsel %vm204, %v219, 0.0
        %v244 = vsel %vm202, %v220, 0.0
        %v245 = vsel %vm203, %v221, 0.0
        %v246 = vsel %vm204, %v222, 0.0
        %v247 = vsel %vm202, %v223, 0.0
        %v248 = vsel %vm203, %v224, 0.0
        %v249 = vsel %vm204, %v225, 0.0
        %v250 = vsel %vm202, %v226, 0.0
        %v251 = vsel %vm203, %v227, 0.0
        %v252 = vsel %vm204, %v228, 0.0
        %p253 = scmp.gt.s32.totalorder %s196, 1
        %s254 = scalar_select %p253, %s196, 1
        %s255 = scvt.s32.f32 %s254
        %v256 = vadd.f32 %v229, %v230
        %vm257 = vcmask 523264
        %v258 = vsel %vm257, %v231, 0.0
        %v259 = vadd.f32 %v256, %v258
        %260 = vadd.xlane.f32.xlu0 %v259
        %v261 = vpop.xlane.xlu0 %260
        %v262 = vadd.f32 %v232, %v233
        %v263 = vsel %vm257, %v234, 0.0
        %v264 = vadd.f32 %v262, %v263
        %265 = vadd.xlane.f32.xlu0 %v264
        %v266 = vpop.xlane.xlu0 %265
        %v267 = vadd.f32 %v235, %v236
        %v268 = vsel %vm257, %v237, 0.0
        %v269 = vadd.f32 %v267, %v268
        %270 = vadd.xlane.f32.xlu0 %v269
        %v271 = vpop.xlane.xlu0 %270
        %v272 = vadd.f32 %v238, %v239
        %v273 = vsel %vm257, %v240, 0.0
        %v274 = vadd.f32 %v272, %v273
        %275 = vadd.xlane.f32.xlu0 %v274
        %v276 = vpop.xlane.xlu0 %275
        %v277 = vadd.f32 %v241, %v242
        %v278 = vsel %vm257, %v243, 0.0
        %v279 = vadd.f32 %v277, %v278
        %280 = vadd.xlane.f32.xlu0 %v279
        %v281 = vpop.xlane.xlu0 %280
        %v282 = vadd.f32 %v244, %v245
        %v283 = vsel %vm257, %v246, 0.0
        %v284 = vadd.f32 %v282, %v283
        %285 = vadd.xlane.f32.xlu0 %v284
        %v286 = vpop.xlane.xlu0 %285
        %v287 = vadd.f32 %v247, %v248
        %v288 = vsel %vm257, %v249, 0.0
        %v289 = vadd.f32 %v287, %v288
        %290 = vadd.xlane.f32.xlu0 %v289
        %v291 = vpop.xlane.xlu0 %290
        %v292 = vadd.f32 %v250, %v251
        %v293 = vsel %vm257, %v252, 0.0
        %v294 = vadd.f32 %v292, %v293
        %295 = vadd.xlane.f32.xlu0 %v294
        %v296 = vpop.xlane.xlu0 %295
        %v297 = vstv %s255
        %v298 = vrcp.pop %v297
        %v299 = vmul.f32 %v261, %v298
        %v300 = vmul.f32 %v266, %v298
        %v301 = vmul.f32 %v271, %v298
        %v302 = vmul.f32 %v276, %v298
        %v303 = vmul.f32 %v281, %v298
        %v304 = vmul.f32 %v286, %v298
        %v305 = vmul.f32 %v291, %v298
        %v306 = vmul.f32 %v296, %v298
        %v307 = vld [vmem:[%s1] sm:$0xf]
        %v309 = vsel %vm257, %v307, 0
        %311 = vmatprep.subr.mxu0 0.0
        %312 = vmatpush1.msra.mxu0 0.0
        %313 = vmatprep.subr.mxu0 0.0
        %314 = vmatpush1.msra.mxu0 0.0
        %315 = vmatprep.subr.mxu0 0.0
        %316 = vmatpush1.msra.mxu0 0.0
        %317 = vmatprep.subr.mxu0 0.0
        %318 = vmatpush1.msra.mxu0 0.0
        %319 = vmatprep.subr.mxu0 0.0
        %320 = vmatpush1.msra.mxu0 0.0
        %321 = vmatprep.subr.mxu0 0.0
        %322 = vmatpush1.msra.mxu0 0.0
        %323 = vmatprep.subr.mxu0 0.0
        %324 = vmatpush1.msra.mxu0 0.0
        %325 = vmatprep.subr.mxu0 0.0
        %326 = vmatpush1.msra.mxu0 0.0
        %327 = vmatprep.subr.mxu0 0.0
        %328 = vmatpush1.msra.mxu0 %v306
        %329 = vmatprep.subr.mxu0 0.0
        %330 = vmatpush1.msra.mxu0 %v305
        %331 = vmatprep.subr.mxu0 0.0
        %332 = vmatpush1.msra.mxu0 %v304
        %333 = vmatprep.subr.mxu0 0.0
        %334 = vmatpush1.msra.mxu0 %v303
        %335 = vmatprep.subr.mxu0 0.0
        %336 = vmatpush1.msra.mxu0 %v302
        %337 = vmatprep.subr.mxu0 0.0
        %338 = vmatpush1.msra.mxu0 %v301
        %339 = vmatprep.subr.mxu0 0.0
        %340 = vmatpush1.msra.mxu0 %v300
        %341 = vmatprep.subr.mxu0 0.0
        %342 = vmatpush1.msra.mxu0 %v299
        %343 = vmatprep.subr.mxu0 0.0
        %344 = vmatpush2.msra.mxu0 0.0
        %345 = vmatprep.subr.mxu0 0.0
        %346 = vmatpush2.msra.mxu0 0.0
        %347 = vmatprep.subr.mxu0 0.0
        %348 = vmatpush2.msra.mxu0 0.0
        %349 = vmatprep.subr.mxu0 0.0
        %350 = vmatpush2.msra.mxu0 0.0
        %351 = vmatprep.subr.mxu0 0.0
        %352 = vmatpush2.msra.mxu0 0.0
        %353 = vmatprep.subr.mxu0 0.0
        %354 = vmatpush2.msra.mxu0 0.0
        %355 = vmatprep.subr.mxu0 0.0
        %356 = vmatpush2.msra.mxu0 0.0
        %357 = vmatprep.subr.mxu0 0.0
        %358 = vmatpush2.msra.mxu0 0.0
        %359 = vmatprep.subr.mxu0 0.0
        %360 = vmatpush2.msra.mxu0 0.0
        %361 = vmatprep.subr.mxu0 0.0
        %362 = vmatpush2.msra.mxu0 0.0
        %363 = vmatprep.subr.mxu0 0.0
        %364 = vmatpush2.msra.mxu0 0.0
        %365 = vmatprep.subr.mxu0 0.0
        %366 = vmatpush2.msra.mxu0 0.0
        %367 = vmatprep.subr.mxu0 0.0
        %368 = vmatpush2.msra.mxu0 0.0
        %369 = vmatprep.subr.mxu0 0.0
        %370 = vmatpush2.msra.mxu0 0.0
        %371 = vmatprep.subr.mxu0 0.0
        %372 = vmatpush2.msra.mxu0 0.0
        %373 = vmatprep.subr.mxu0 0.0
        %374 = vmatpush2.msra.mxu0 0.0
        %375 = vmatprep.mubr.f32.mxu0 0.0
        %376 = vmatmul.mubr.f32.gmra.mxu0 %v309
        %v377 = vpop.f32.mrf.mxu0
        %v378 = vadd.f32 0.0, %v377
        %v379 = vpop.f32.mrf.mxu0
        %380 = vdwg.mxu0
        %v381 = vmax.f32 %v378, 0.0
        %v382 = vld [vmem:[%s2] sm:$0xff]
        %v383 = vld [vmem:[%s2 + $0x8] sm:$0xff]
        %v384 = vld [vmem:[%s2 + $0x10] sm:$0xff]
        %v385 = vld [vmem:[%s2 + $0x18] sm:$0xff]
        %v386 = vld [vmem:[%s2 + $0x20] sm:$0xff]
        %v387 = vld [vmem:[%s2 + $0x28] sm:$0xff]
        %v388 = vld [vmem:[%s2 + $0x30] sm:$0xff]
        %v389 = vld [vmem:[%s2 + $0x38] sm:$0xff]
        %vm390 = vcmask 31744
        %v392 = vsel %vm390, %v382, 0
        %v395 = vsel %vm390, %v383, 0
        %v398 = vsel %vm390, %v384, 0
        %v401 = vsel %vm390, %v385, 0
        %v404 = vsel %vm390, %v386, 0
        %v407 = vsel %vm390, %v387, 0
        %v410 = vsel %vm390, %v388, 0
        %v413 = vsel %vm390, %v389, 0
        %vm415 = vcmask 1043456
        %v417 = vsel %vm415, %v381, 0
        %419 = vmatprep.subr.mxu0 0.0
        %420 = vmatpush1.msra.mxu0 0.0
        %421 = vmatprep.subr.mxu0 0.0
        %422 = vmatpush1.msra.mxu0 0.0
        %423 = vmatprep.subr.mxu0 0.0
        %424 = vmatpush1.msra.mxu0 0.0
        %425 = vmatprep.subr.mxu0 0.0
        %426 = vmatpush1.msra.mxu0 0.0
        %427 = vmatprep.subr.mxu0 0.0
        %428 = vmatpush1.msra.mxu0 0.0
        %429 = vmatprep.subr.mxu0 0.0
        %430 = vmatpush1.msra.mxu0 0.0
        %431 = vmatprep.subr.mxu0 0.0
        %432 = vmatpush1.msra.mxu0 0.0
        %433 = vmatprep.subr.mxu0 0.0
        %434 = vmatpush1.msra.mxu0 0.0
        %435 = vmatprep.subr.mxu0 0.0
        %436 = vmatpush1.msra.mxu0 0.0
        %437 = vmatprep.subr.mxu0 0.0
        %438 = vmatpush1.msra.mxu0 0.0
        %439 = vmatprep.subr.mxu0 0.0
        %440 = vmatpush1.msra.mxu0 0.0
        %441 = vmatprep.subr.mxu0 0.0
        %442 = vmatpush1.msra.mxu0 0.0
        %443 = vmatprep.subr.mxu0 0.0
        %444 = vmatpush1.msra.mxu0 0.0
        %445 = vmatprep.subr.mxu0 0.0
        %446 = vmatpush1.msra.mxu0 0.0
        %447 = vmatprep.subr.mxu0 0.0
        %448 = vmatpush1.msra.mxu0 0.0
        %449 = vmatprep.subr.mxu0 0.0
        %450 = vmatpush1.msra.mxu0 %v417
        %451 = vmatprep.subr.mxu0 0.0
        %452 = vmatpush2.msra.mxu0 0.0
        %453 = vmatprep.subr.mxu0 0.0
        %454 = vmatpush2.msra.mxu0 0.0
        %455 = vmatprep.subr.mxu0 0.0
        %456 = vmatpush2.msra.mxu0 0.0
        %457 = vmatprep.subr.mxu0 0.0
        %458 = vmatpush2.msra.mxu0 0.0
        %459 = vmatprep.subr.mxu0 0.0
        %460 = vmatpush2.msra.mxu0 0.0
        %461 = vmatprep.subr.mxu0 0.0
        %462 = vmatpush2.msra.mxu0 0.0
        %463 = vmatprep.subr.mxu0 0.0
        %464 = vmatpush2.msra.mxu0 0.0
        %465 = vmatprep.subr.mxu0 0.0
        %466 = vmatpush2.msra.mxu0 0.0
        %467 = vmatprep.subr.mxu0 0.0
        %468 = vmatpush2.msra.mxu0 0.0
        %469 = vmatprep.subr.mxu0 0.0
        %470 = vmatpush2.msra.mxu0 0.0
        %471 = vmatprep.subr.mxu0 0.0
        %472 = vmatpush2.msra.mxu0 0.0
        %473 = vmatprep.subr.mxu0 0.0
        %474 = vmatpush2.msra.mxu0 0.0
        %475 = vmatprep.subr.mxu0 0.0
        %476 = vmatpush2.msra.mxu0 0.0
        %477 = vmatprep.subr.mxu0 0.0
        %478 = vmatpush2.msra.mxu0 0.0
        %479 = vmatprep.subr.mxu0 0.0
        %480 = vmatpush2.msra.mxu0 0.0
        %481 = vmatprep.subr.mxu0 0.0
        %482 = vmatpush2.msra.mxu0 0.0
        %483 = vmatprep.mubr.f32.mxu0 0.0
        %484 = vmatmul.mubr.f32.gmra.mxu0 %v392
        %v485 = vpop.f32.mrf.mxu0
        %v486 = vadd.f32 0.0, %v485
        %v487 = vpop.f32.mrf.mxu0
        %488 = vmatprep.mubr.f32.mxu0 0.0
        %489 = vmatmul.mubr.f32.gmra.mxu0 %v395
        %v490 = vpop.f32.mrf.mxu0
        %v491 = vadd.f32 0.0, %v490
        %v492 = vpop.f32.mrf.mxu0
        %493 = vmatprep.mubr.f32.mxu0 0.0
        %494 = vmatmul.mubr.f32.gmra.mxu0 %v398
        %v495 = vpop.f32.mrf.mxu0
        %v496 = vadd.f32 0.0, %v495
        %v497 = vpop.f32.mrf.mxu0
        %498 = vmatprep.mubr.f32.mxu0 0.0
        %499 = vmatmul.mubr.f32.gmra.mxu0 %v401
        %v500 = vpop.f32.mrf.mxu0
        %v501 = vadd.f32 0.0, %v500
        %v502 = vpop.f32.mrf.mxu0
        %503 = vmatprep.mubr.f32.mxu0 0.0
        %504 = vmatmul.mubr.f32.gmra.mxu0 %v404
        %v505 = vpop.f32.mrf.mxu0
        %v506 = vadd.f32 0.0, %v505
        %v507 = vpop.f32.mrf.mxu0
        %508 = vmatprep.mubr.f32.mxu0 0.0
        %509 = vmatmul.mubr.f32.gmra.mxu0 %v407
        %v510 = vpop.f32.mrf.mxu0
        %v511 = vadd.f32 0.0, %v510
        %v512 = vpop.f32.mrf.mxu0
        %513 = vmatprep.mubr.f32.mxu0 0.0
        %514 = vmatmul.mubr.f32.gmra.mxu0 %v410
        %v515 = vpop.f32.mrf.mxu0
        %v516 = vadd.f32 0.0, %v515
        %v517 = vpop.f32.mrf.mxu0
        %518 = vmatprep.mubr.f32.mxu0 0.0
        %519 = vmatmul.mubr.f32.gmra.mxu0 %v413
        %v520 = vpop.f32.mrf.mxu0
        %v521 = vadd.f32 0.0, %v520
        %v522 = vpop.f32.mrf.mxu0
        %523 = vdwg.mxu0
        %v524 = vxor.u32 %v486, 2147483648
        %v525 = vxor.u32 %v491, 2147483648
        %v526 = vxor.u32 %v496, 2147483648
        %v527 = vxor.u32 %v501, 2147483648
        %v528 = vxor.u32 %v506, 2147483648
        %v529 = vxor.u32 %v511, 2147483648
        %v530 = vxor.u32 %v516, 2147483648
        %v531 = vxor.u32 %v521, 2147483648
        %v532 = vmul.f32 %v524, 1.442695
        %v533 = vpow.pop %v532
        %v534 = vmul.f32 %v525, 1.442695
        %v535 = vpow.pop %v534
        %v536 = vmul.f32 %v526, 1.442695
        %v537 = vpow.pop %v536
        %v538 = vmul.f32 %v527, 1.442695
        %v539 = vpow.pop %v538
        %v540 = vmul.f32 %v528, 1.442695
        %v541 = vpow.pop %v540
        %v542 = vmul.f32 %v529, 1.442695
        %v543 = vpow.pop %v542
        %v544 = vmul.f32 %v530, 1.442695
        %v545 = vpow.pop %v544
        %v546 = vmul.f32 %v531, 1.442695
        %v547 = vpow.pop %v546
        %v548 = vadd.f32 %v533, 1.0
        %v549 = vadd.f32 %v535, 1.0
        %v550 = vadd.f32 %v537, 1.0
        %v551 = vadd.f32 %v539, 1.0
        %v552 = vadd.f32 %v541, 1.0
        %v553 = vadd.f32 %v543, 1.0
        %v554 = vadd.f32 %v545, 1.0
        %v555 = vadd.f32 %v547, 1.0
        %v556 = vrcp.pop %v548
        %v557 = vmul.f32 1.0, %v556
        %v558 = vrcp.pop %v549
        %v559 = vmul.f32 1.0, %v558
        %v560 = vrcp.pop %v550
        %v561 = vmul.f32 1.0, %v560
        %v562 = vrcp.pop %v551
        %v563 = vmul.f32 1.0, %v562
        %v564 = vrcp.pop %v552
        %v565 = vmul.f32 1.0, %v564
        %v566 = vrcp.pop %v553
        %v567 = vmul.f32 1.0, %v566
        %v568 = vrcp.pop %v554
        %v569 = vmul.f32 1.0, %v568
        %v570 = vrcp.pop %v555
        %v571 = vmul.f32 1.0, %v570
        %573 = vset.pattern.permute.xlu0 0
        %574 = vperm.xlu0 %573, %v557
        %v575 = vpop.permute.xlu0 %574
        %578 = vset.pattern.permute.xlu0 0
        %579 = vperm.xlu0 %578, %v559
        %v580 = vpop.permute.xlu0 %579
        %583 = vset.pattern.permute.xlu0 0
        %584 = vperm.xlu0 %583, %v561
        %v585 = vpop.permute.xlu0 %584
        %588 = vset.pattern.permute.xlu0 0
        %589 = vperm.xlu0 %588, %v563
        %v590 = vpop.permute.xlu0 %589
        %593 = vset.pattern.permute.xlu0 0
        %594 = vperm.xlu0 %593, %v565
        %v595 = vpop.permute.xlu0 %594
        %598 = vset.pattern.permute.xlu0 0
        %599 = vperm.xlu0 %598, %v567
        %v600 = vpop.permute.xlu0 %599
        %603 = vset.pattern.permute.xlu0 0
        %604 = vperm.xlu0 %603, %v569
        %v605 = vpop.permute.xlu0 %604
        %608 = vset.pattern.permute.xlu0 0
        %609 = vperm.xlu0 %608, %v571
        %v610 = vpop.permute.xlu0 %609
        %v612 = vmul.f32 %v205, %v575
        %v613 = vmul.f32 %v206, %v575
        %v614 = vmul.f32 %v207, %v575
        %v615 = vmul.f32 %v208, %v580
        %v616 = vmul.f32 %v209, %v580
        %v617 = vmul.f32 %v210, %v580
        %v618 = vmul.f32 %v211, %v585
        %v619 = vmul.f32 %v212, %v585
        %v620 = vmul.f32 %v213, %v585
        %v621 = vmul.f32 %v214, %v590
        %v622 = vmul.f32 %v215, %v590
        %v623 = vmul.f32 %v216, %v590
        %v624 = vmul.f32 %v217, %v595
        %v625 = vmul.f32 %v218, %v595
        %v626 = vmul.f32 %v219, %v595
        %v627 = vmul.f32 %v220, %v600
        %v628 = vmul.f32 %v221, %v600
        %v629 = vmul.f32 %v222, %v600
        %v630 = vmul.f32 %v223, %v605
        %v631 = vmul.f32 %v224, %v605
        %v632 = vmul.f32 %v225, %v605
        %v633 = vmul.f32 %v226, %v610
        %v634 = vmul.f32 %v227, %v610
        %v635 = vmul.f32 %v228, %v610
        %636 = vst [vmem:[%s195] sm:$0xff] %v612
        %637 = vst [vmem:[%s195 + $0x8] sm:$0xff] %v613
        %638 = vst.msk [vmem:[%s195 + $0x10] sm:$0xff] %vm257, %v614
        %639 = vst [vmem:[%s195 + $0x18] sm:$0xff] %v615
        %640 = vst [vmem:[%s195 + $0x20] sm:$0xff] %v616
        %641 = vst.msk [vmem:[%s195 + $0x28] sm:$0xff] %vm257, %v617
        %642 = vst [vmem:[%s195 + $0x30] sm:$0xff] %v618
        %643 = vst [vmem:[%s195 + $0x38] sm:$0xff] %v619
        %644 = vst.msk [vmem:[%s195 + $0x40] sm:$0xff] %vm257, %v620
        %645 = vst [vmem:[%s195 + $0x48] sm:$0xff] %v621
        %646 = vst [vmem:[%s195 + $0x50] sm:$0xff] %v622
        %647 = vst.msk [vmem:[%s195 + $0x58] sm:$0xff] %vm257, %v623
        %648 = vst [vmem:[%s195 + $0x60] sm:$0xff] %v624
        %649 = vst [vmem:[%s195 + $0x68] sm:$0xff] %v625
        %650 = vst.msk [vmem:[%s195 + $0x70] sm:$0xff] %vm257, %v626
        %651 = vst [vmem:[%s195 + $0x78] sm:$0xff] %v627
        %652 = vst [vmem:[%s195 + $0x80] sm:$0xff] %v628
        %653 = vst.msk [vmem:[%s195 + $0x88] sm:$0xff] %vm257, %v629
        %654 = vst [vmem:[%s195 + $0x90] sm:$0xff] %v630
        %655 = vst [vmem:[%s195 + $0x98] sm:$0xff] %v631
        %656 = vst.msk [vmem:[%s195 + $0xa0] sm:$0xff] %vm257, %v632
        %657 = vst [vmem:[%s195 + $0xa8] sm:$0xff] %v633
        %658 = vst [vmem:[%s195 + $0xb0] sm:$0xff] %v634
        %659 = vst.msk [vmem:[%s195 + $0xb8] sm:$0xff] %vm257, %v635
        %s660 = sand.u32 %s103, 1
        %s661 = scalar_lea.sflag [#allocation6], %s660
        %s662 = sand.u32 %s103, 1
        %s663 = smul.addr %s662, 192
        %s664 = scalar_lea.vmem [#allocation7], %s663
        // Predicated region
        $region37: #{se_block.1} parent=31 // pred_check
          %p665 = pneg %p113
        $region38: #{se_block.1} parent=31 // pred_check_branch
          %667 = sbr.rel (%p665) target = $region40
        $region39: #{se_block.1} parent=31 // pred_region
          %s669 = ssub.s32 3072, 3072
          %670 = vsyncadd %s661, %s669
          %s671 = smul.addr %s27, 24
          %s672 = smul.addr %s671, 128
          %s673 = scalar_lea.hbm %s4, %s672
          %s674 = sshll.u32 %s664, 4
          %s675 = int_to_ptr.vmem [resolvable:$true] %s674
          %680 = dma.vmem_to_hbm [thread:$0]  %s675, 3072, %s673, %s661, 384, 384, 24
        $region40: #{se_block.1} parent=31 // pred_fallthru
          _
      $region32: #{se_block.1} parent=5 // pred_fallthru
        _
      %p681 = scmp.le.s32.totalorder 2, %s22
      // Predicated region
      $region41: #{se_block.1} parent=5 // pred_check
        %p682 = pneg %p681
      $region42: #{se_block.1} parent=5 // pred_check_branch
        %684 = sbr.rel (%p682) target = $region44
      $region43: #{se_block.1} parent=5 // pred_region
        %s685 = ssub.s32 %s22, 2
        // Predicated region
        $region45: #{se_block.1} parent=43 // pred_check
          %p686 = pneg %p119
        $region46: #{se_block.1} parent=43 // pred_check_branch
          %688 = sbr.rel (%p686) target = $region48
        $region47: #{se_block.1} parent=43 // pred_region
          %s689 = sand.u32 %s104, 1
          %s690 = scalar_lea.sflag [#allocation6], %s689
          %s691 = sand.u32 %s104, 1
          %s692 = smul.addr %s691, 192
          %s693 = scalar_lea.vmem [#allocation7], %s692
          %694 = dma.done %s690, 3072
        $region48: #{se_block.1} parent=43 // pred_fallthru
          _
      $region44: #{se_block.1} parent=5 // pred_fallthru
        _
    $region6: #{se_block.1} parent=1 // loop_footer
      %s26 = sadd.s32 1, %s22
    $region7: #{se_block.1} parent=1 // loop_footer_branch
      %21 = sbr.rel target = $region3
    $region8: #{se_block.1} parent=1 // loop_exit
      _
    %695 = vsyncpa [#allocation5], 1
    %s696 = scalar_lea.sflag [#allocation5], 1
    %697 = vsyncpa %s696, 1
    %698 = vsyncpa [#allocation6], 1
    %s699 = scalar_lea.sflag [#allocation6], 1
    %700 = vsyncpa %s699, 1

</llo_original>
